<compile_context>
chip_gen: v6e
topology: v6e:2x2x1
jax: 0.10.0
libtpu: 0.0.40
codegen_flags: <defaults>
</compile_context>

<pallas_src>
from functools import partial

import jax
import jax.numpy as jnp
from jax.experimental import pallas as pl
from jax.experimental.pallas import tpu as pltpu


def _cdiv(a, b):
    return (a + b - 1) // b


def _round_up(a, b):
    return _cdiv(a, b) * b


def _sublane_multiple(dtype) -> int:
    # minimum second-minor tile: 8 sublanes for 4-byte, 16 for 2-byte, 32 for 1-byte dtypes
    return {4: 8, 2: 16, 1: 32}.get(jnp.dtype(dtype).itemsize, 8)


# ------------------------------ BCEWithLogits (mean) -----------------------------------------

def _bce_partial_kernel(x_ref, y_ref, out_ref, *, n_rows, n_cols, needs_mask):
    """Per-lane partial sums of elementwise BCEWithLogits, accumulated over the column axis.

    x_ref, y_ref : VMEM (tb, tn)      logits / targets tile (native dtype, cast to f32 here)
    out_ref      : VMEM (1, 1, tn) f32 resident accumulator block for this row stripe
    """
    j = pl.program_id(1)

    @pl.when(j == 0)
    def _init():
        out_ref[...] = jnp.zeros_like(out_ref)

    x = x_ref[...].astype(jnp.float32)
    y = y_ref[...].astype(jnp.float32)
    # numerically stable BCE-with-logits: max(x, 0) - x*y + log1p(exp(-|x|))
    bce = jnp.maximum(x, 0.0) - x * y + jnp.log1p(jnp.exp(-jnp.abs(x)))

    if needs_mask:
        i = pl.program_id(0)
        tb, tn = x_ref.shape
        row = jax.lax.broadcasted_iota(jnp.int32, (tb, tn), 0) + i * tb
        col = jax.lax.broadcasted_iota(jnp.int32, (tb, tn), 1) + j * tn
        bce = jnp.where((row < n_rows) & (col < n_cols), bce, 0.0)

    out_ref[...] += jnp.sum(bce, axis=0)[None, None, :]


def _bce_tiles(n_rows, n_cols, itemsize):
    """Pick (row_tile, lane_tile): legal for the (8,128)/full-dim rule, ~4 MiB per input block."""
    sub = {4: 8, 2: 16, 1: 32}.get(itemsize, 8)
    lane_cap = 1024
    tn = n_cols if n_cols <= lane_cap else lane_cap          # full dim, or multiple of 128
    target_bytes = 4 << 20                                   # ~4 MiB per input block per step
    tb_cap = max(sub, (target_bytes // max(1, tn * itemsize)) // sub * sub)
    if n_rows > tb_cap:
        tb = tb_cap
    elif n_rows >= 2 * sub and n_rows * n_cols * itemsize >= (2 << 20):
        # enough data to matter: split rows into >= 2 blocks so v7x's two TensorCores
        # ("parallel" row axis) each run part of the reduction.
        tb = _round_up(_cdiv(n_rows, 2), sub)
    else:
        tb = n_rows                                          # full dim -> always legal
    return tb, tn


def bce_with_logits_mean(logits, targets, *, row_tile=None, lane_tile=None):
    """mean(BCEWithLogits(logits, targets)) over all elements, computed copy-free in Pallas."""
    assert logits.shape == targets.shape
    if logits.ndim != 2:
        logits = logits.reshape(-1, logits.shape[-1])
        targets = targets.reshape(-1, targets.shape[-1])
    n_rows, n_cols = logits.shape
    itemsize = jnp.dtype(logits.dtype).itemsize

    tb, tn = _bce_tiles(n_rows, n_cols, itemsize)
    if row_tile is not None:
        tb = row_tile
    if lane_tile is not None:
        tn = lane_tile

    grid = (_cdiv(n_rows, tb), _cdiv(n_cols, tn))
    needs_mask = (n_rows % tb != 0) or (n_cols % tn != 0)
    block_bytes = tb * tn * itemsize

    kernel = partial(_bce_partial_kernel, n_rows=n_rows, n_cols=n_cols, needs_mask=needs_mask)

    cost = pl.CostEstimate(
        flops=int(6 * n_rows * n_cols),
        transcendentals=int(2 * n_rows * n_cols),
        bytes_accessed=int(2 * n_rows * n_cols * itemsize + grid[0] * tn * 4),
    )

    partials = pl.pallas_call(
        kernel,
        out_shape=jax.ShapeDtypeStruct((grid[0], 1, tn), jnp.float32),
        grid_spec=pltpu.PrefetchScalarGridSpec(
            num_scalar_prefetch=0,
            grid=grid,
            in_specs=[
                pl.BlockSpec((tb, tn), lambda i, j: (i, j)),   # logits tile
                pl.BlockSpec((tb, tn), lambda i, j: (i, j)),   # targets tile
            ],
            # same block for all j -> resident accumulator per row stripe; distinct block per i
            # -> safe to shard the row axis across cores.
            out_specs=pl.BlockSpec((1, 1, tn), lambda i, j: (i, 0, 0)),
        ),
        compiler_params=pltpu.CompilerParams(
            dimension_semantics=("parallel", "arbitrary"),     # rows parallel, columns = reduction
            # x + y double-buffered can exceed v5e's 16 MiB default scoped VMEM at 4 MiB blocks.
            vmem_limit_bytes=int(max(32 << 20, 5 * block_bytes)),
        ),
        cost_estimate=cost,
    )(logits, targets)

    return jnp.sum(partials) * (1.0 / float(n_rows * n_cols))


# --------------------------- recursive hierarchy regularization ------------------------------

def _rec_reg_kernel(wp_ref, wc_ref, out_ref):
    """Streams (pair_tile, H) parent/child chunks; accumulates 0.5 * sum((wp - wc)^2) in SMEM."""
    @pl.when(pl.program_id(0) == 0)
    def _init():
        out_ref[0, 0] = jnp.float32(0.0)

    d = wp_ref[...].astype(jnp.float32) - wc_ref[...].astype(jnp.float32)
    out_ref[0, 0] += 0.5 * jnp.sum(d * d)


def recursive_regularization(recursive_params, parent_idx, child_idx, *, pair_tile=None):
    """sum over (parent, child) pairs of 0.5 * ||W[parent] - W[child]||_2^2."""
    num_labels, hidden = recursive_params.shape
    n_pairs = int(parent_idx.shape[0])
    if n_pairs == 0:
        return jnp.float32(0.0)

    pidx = parent_idx.astype(jnp.int32)
    cidx = child_idx.astype(jnp.int32)
    # Out-of-range pairs contribute exactly zero (parent == child == row 0) instead of silently
    # clipping to a wrong-but-valid row.
    valid = (pidx >= 0) & (pidx < num_labels) & (cidx >= 0) & (cidx < num_labels)
    pidx = jnp.where(valid, pidx, 0)
    cidx = jnp.where(valid, cidx, 0)

    itemsize = jnp.dtype(recursive_params.dtype).itemsize
    sub = _sublane_multiple(recursive_params.dtype)
    if pair_tile is None:
        target_bytes = 2 << 20                               # ~2 MiB per streamed chunk
        pair_tile = max(sub, min(512, (target_bytes // max(1, hidden * itemsize)) // sub * sub))
        pair_tile = min(pair_tile, _round_up(n_pairs, sub))
    n_pairs_pad = _round_up(n_pairs, pair_tile)

    # Pad the (tiny) index vectors with 0: padded pairs gather identical rows -> zero diff.
    pidx = jnp.zeros((n_pairs_pad,), jnp.int32).at[:n_pairs].set(pidx)
    cidx = jnp.zeros((n_pairs_pad,), jnp.int32).at[:n_pairs].set(cidx)

    # TODO(synk): the data-dependent row gather has no efficient blocked Pallas equivalent on TPU
    # (per-row DMAs / per-pair grid steps are descriptor- and step-overhead bound), so the gather
    # is left to XLA and the gathered pairs are streamed through the kernel in large chunks.
    wp = jnp.take(recursive_params, pidx, axis=0)
    wc = jnp.take(recursive_params, cidx, axis=0)

    out = pl.pallas_call(
        _rec_reg_kernel,
        out_shape=jax.ShapeDtypeStruct((1, 1), jnp.float32),
        grid_spec=pltpu.PrefetchScalarGridSpec(
            num_scalar_prefetch=0,
            grid=(n_pairs_pad // pair_tile,),
            in_specs=[
                pl.BlockSpec((pair_tile, hidden), lambda p: (p, 0)),   # parent rows chunk
                pl.BlockSpec((pair_tile, hidden), lambda p: (p, 0)),   # child rows chunk
            ],
            out_specs=pl.BlockSpec(memory_space=pltpu.MemorySpace.SMEM),
        ),
        compiler_params=pltpu.CompilerParams(
            dimension_semantics=("arbitrary",),
            vmem_limit_bytes=32 << 20,
        ),
    )(wp, wc)
    return out[0, 0]


# --------------------------------------- module forward --------------------------------------

def classification_loss(logits, targets, recursive_params, parent_idx, child_idx,
                        recursive_penalty, recursive_constraint=True):
    """JAX/Pallas equivalent of ClassificationLoss.forward (single-tensor recursive_params)."""
    loss_class = bce_with_logits_mean(logits, targets)
    if recursive_constraint and parent_idx is not None and int(parent_idx.shape[0]) > 0:
        # TODO(synk): the torch module also accepts a *list* of per-layer params; only the
        # single-tensor (num_labels, hidden_dim) case is implemented here.
        reg = recursive_regularization(recursive_params, parent_idx, child_idx)
        # penalty applied in JAX so a traced (non-Python-float) penalty works under jit.
        return loss_class + recursive_penalty * reg
    return loss_class


# ------------------------------------------ checks --------------------------------------------

def _reference_loss(logits, targets, params, relation, penalty):
    """Pure-JAX reference mirroring the PyTorch forward."""
    x = logits.astype(jnp.float32)
    y = targets.astype(jnp.float32)
    bce = jnp.mean(jnp.maximum(x, 0.0) - x * y + jnp.log1p(jnp.exp(-jnp.abs(x))))
    reg = jnp.float32(0.0)
    for parent, children in relation.items():
        for c in children:
            d = params[parent] - params[c]
            reg = reg + 0.5 * jnp.sum(d * d)
    return bce + penalty * reg


def _close(a, b, rtol=1e-4, atol=1e-5):
    return abs(float(a) - float(b)) <= atol + rtol * abs(float(b))


if __name__ == "__main__":
    key = jax.random.PRNGKey(0)

    # ---- case 1: small shapes implied by the module (batch=2, num_labels=8, hidden=32) -------
    B, N, H = 2, 8, 32
    k1, k2, k3 = jax.random.split(key, 3)
    logits = jax.random.normal(k1, (B, N), dtype=jnp.float32)
    targets = jax.random.bernoulli(k2, 0.5, (B, N)).astype(jnp.float32)
    recursive_params = 0.1 * jax.random.normal(k3, (N, H), dtype=jnp.float32)

    # TODO(synk): get_hierarchy_relations parses a taxonomy file; replaced with a deterministic
    # synthetic hierarchy (same structure: parent -> list of children).
    relation = {0: [1, 2, 3], 1: [4, 5], 2: [6, 7]}
    parents, children = [], []
    for p, cs in relation.items():
        for c in cs:
            parents.append(p)
            children.append(c)
    parent_idx = jnp.asarray(parents, dtype=jnp.int32)
    child_idx = jnp.asarray(children, dtype=jnp.int32)
    recursive_penalty = 1e-4

    loss = classification_loss(logits, targets, recursive_params,
                               parent_idx, child_idx, recursive_penalty,
                               recursive_constraint=True)
    loss = jax.block_until_ready(loss)
    ref = jax.block_until_ready(
        _reference_loss(logits, targets, recursive_params, relation, recursive_penalty))
    assert _close(loss, ref), (float(loss), float(ref))

    # no-constraint path
    loss_nc = jax.block_until_ready(
        classification_loss(logits, targets, recursive_params,
                            parent_idx, child_idx, recursive_penalty,
                            recursive_constraint=False))
    ref_nc = jax.block_until_ready(
        jnp.mean(jnp.maximum(logits, 0.0) - logits * targets
                 + jnp.log1p(jnp.exp(-jnp.abs(logits)))))
    assert _close(loss_nc, ref_nc), (float(loss_nc), float(ref_nc))

    # ---- case 2: ragged shape + forced small tiles to exercise the in-kernel edge masks ------
    B2, N2 = 13, 200
    k4, k5 = jax.random.split(k3, 2)
    logits2 = jax.random.normal(k4, (B2, N2), dtype=jnp.float32)
    targets2 = jax.random.bernoulli(k5, 0.3, (B2, N2)).astype(jnp.float32)
    bce2 = jax.block_until_ready(
        bce_with_logits_mean(logits2, targets2, row_tile=8, lane_tile=128))
    ref2 = jax.block_until_ready(
        jnp.mean(jnp.maximum(logits2, 0.0) - logits2 * targets2
                 + jnp.log1p(jnp.exp(-jnp.abs(logits2)))))
    assert _close(bce2, ref2), (float(bce2), float(ref2))

    print("KERNEL_OK")
</pallas_src>

<mosaic_0001>
module attributes {stable_mosaic.version = 11 : i64} {
  func.func @_bce_partial_kernel(%arg0: i32, %arg1: i32, %arg2: memref<2x8xf32, #tpu.memory_space<vmem>>, %arg3: memref<2x8xf32, #tpu.memory_space<vmem>>, %arg4: memref<1x1x8xf32, #tpu.memory_space<vmem>>) attributes {dimension_semantics = [#tpu.dimension_semantics<parallel>, #tpu.dimension_semantics<arbitrary>], iteration_bounds = array<i64: 1, 1>, scalar_prefetch = 0 : i64, scratch_operands = 0 : i64, tpu.core_type = #tpu.core_type<tc>, window_params = [{transform_indices = @transform_0, window_bounds = array<i64: 2, 8>}, {transform_indices = @transform_1, window_bounds = array<i64: 2, 8>}, {transform_indices = @transform_2, window_bounds = array<i64: 1, 1, 8>}]} {
    %c0_i32 = arith.constant 0 : i32
    %0 = arith.cmpi eq, %arg1, %c0_i32 : i32
    %1 = arith.extui %0 : i1 to i32
    %c0_i32_0 = arith.constant 0 : i32
    %2 = arith.cmpi ne, %1, %c0_i32_0 : i32
    scf.if %2 {
      %cst_12 = arith.constant 0.000000e+00 : f32
      %20 = vector.broadcast %cst_12 : f32 to vector<1x1x8xf32>
      %c0_13 = arith.constant 0 : index
      %c0_14 = arith.constant 0 : index
      %c0_15 = arith.constant 0 : index
      %21 = vector.load %arg4[%c0_13, %c0_14, %c0_15] : memref<1x1x8xf32, #tpu.memory_space<vmem>>, vector<1x1x8xf32>
      tpu.vector_store %arg4[%c0_13, %c0_14, %c0_15], %20 {strides = array<i32>} : memref<1x1x8xf32, #tpu.memory_space<vmem>>, vector<1x1x8xf32>,
    } else {
    }
    %c0 = arith.constant 0 : index
    %c0_1 = arith.constant 0 : index
    %3 = vector.load %arg2[%c0, %c0_1] : memref<2x8xf32, #tpu.memory_space<vmem>>, vector<2x8xf32>
    %c0_2 = arith.constant 0 : index
    %c0_3 = arith.constant 0 : index
    %4 = vector.load %arg3[%c0_2, %c0_3] : memref<2x8xf32, #tpu.memory_space<vmem>>, vector<2x8xf32>
    %cst = arith.constant 0.000000e+00 : f32
    %5 = vector.broadcast %cst : f32 to vector<2x8xf32>
    %6 = arith.maximumf %3, %5 : vector<2x8xf32>
    %7 = arith.mulf %3, %4 : vector<2x8xf32>
    %8 = arith.subf %6, %7 : vector<2x8xf32>
    %9 = math.absf %3 : vector<2x8xf32>
    %cst_4 = arith.constant 0.000000e+00 : f32
    %10 = vector.broadcast %cst_4 : f32 to vector<2x8xf32>
    %11 = arith.subf %10, %9 : vector<2x8xf32>
    %12 = math.exp %11 : vector<2x8xf32>
    %13 = math.log1p %12 : vector<2x8xf32>
    %14 = arith.addf %8, %13 : vector<2x8xf32>
    %c0_5 = arith.constant 0 : index
    %c0_6 = arith.constant 0 : index
    %c0_7 = arith.constant 0 : index
    %15 = vector.load %arg4[%c0_5, %c0_6, %c0_7] : memref<1x1x8xf32, #tpu.memory_space<vmem>>, vector<1x1x8xf32>
    %cst_8 = arith.constant dense<0.000000e+00> : vector<8xf32>
    %16 = vector.multi_reduction <add>, %14, %cst_8 [0] : vector<2x8xf32> to vector<8xf32>
    %17 = vector.shape_cast %16 : vector<8xf32> to vector<1x1x8xf32>
    %18 = arith.addf %15, %17 : vector<1x1x8xf32>
    %c0_9 = arith.constant 0 : index
    %c0_10 = arith.constant 0 : index
    %c0_11 = arith.constant 0 : index
    %19 = vector.load %arg4[%c0_9, %c0_10, %c0_11] : memref<1x1x8xf32, #tpu.memory_space<vmem>>, vector<1x1x8xf32>
    tpu.vector_store %arg4[%c0_9, %c0_10, %c0_11], %18 {strides = array<i32>} : memref<1x1x8xf32, #tpu.memory_space<vmem>>, vector<1x1x8xf32>,
    return
  }
  func.func @transform_0(%arg0: i32, %arg1: i32) -> (i32, i32) {
    %c0_i32 = arith.constant 0 : i32
    return %arg0, %arg1 : i32, i32
  }
  func.func @transform_1(%arg0: i32, %arg1: i32) -> (i32, i32) {
    %c0_i32 = arith.constant 0 : i32
    return %arg0, %arg1 : i32, i32
  }
  func.func @transform_2(%arg0: i32, %arg1: i32) -> (i32, i32, i32) {
    %c0_i32 = arith.constant 0 : i32
    %c0_i32_0 = arith.constant 0 : i32
    %c0_i32_1 = arith.constant 0 : i32
    return %arg0, %c0_i32, %c0_i32_0 : i32, i32, i32
  }
}

</mosaic_0001>

<llo_original>
// kernel: tpu_custom_call.1
$region0: #{tpu_custom_call.1}
  #allocation0 [shape = 'u32[]', space=smem, size = 0x4, offset = 0x4, fixed_abs, tag = 'smem constant byte address 0x4 - core index']
  #allocation1 [shape = 'u32[144,128]{1,0:T(1,128)}', space=vmem, size = 0x12000, scoped, tag = 'internal scratch']
  %s0 = inlined_call_operand.hbm [shape: f32[2,8], index: 0, kind: input, shape index: {}]
  %s1 = inlined_call_operand.hbm [shape: f32[2,8], index: 1, kind: input, shape index: {}]
  %s2 = inlined_call_operand.hbm [shape: f32[1,1,8], index: 2, kind: output, shape index: {}]
  %s3 = sld [smem:[#allocation0]]
  $region30: #{tpu_custom_call.1} parent=0
    _
  %s5 = ssub.s32 1, %s3
  %s6 = scalar_select 0, %s5, %s3
  $region1: #{tpu_custom_call.1} parent=0
    #allocation2 [shape = 'u8[1024]{0}', space=vmem, size = 0x400, scoped, tag = 'input window, operand 0, single buffered']
    #allocation3 [shape = 's32[1]{0}', space=sflag, size = 0x4, scoped, tag = 'scoped memory for tpu_custom_call.1']
    #allocation4 [shape = 's32[1]{0}', space=sflag, size = 0x4, scoped, tag = 'scoped memory for tpu_custom_call.1']
    #allocation5 [shape = 'u8[1024]{0}', space=vmem, size = 0x400, scoped, tag = 'input window, operand 1, single buffered']
    #allocation6 [shape = 's32[1]{0}', space=sflag, size = 0x4, scoped, tag = 'scoped memory for tpu_custom_call.1']
    #allocation7 [shape = 'u8[512]{0}', space=vmem, size = 0x400, scoped, tag = 'output window, operand 0, single buffered']
    %7 = vsyncpa [#allocation3], 0
    %8 = vsyncpa [#allocation6], 0
    %9 = vsyncpa [#allocation4], 0
    // Predicated region
    $region2: #{tpu_custom_call.1} parent=1 // pred_check
      _
    $region3: #{tpu_custom_call.1} parent=1 // pred_check_branch
      %11 = sbr.rel (0) target = $region5
    $region4: #{tpu_custom_call.1} parent=1 // pred_region
      %s13 = ssub.s32 32, 32
      %14 = vsyncadd [#allocation3], %s13
      %s16 = sshll.u32 [#allocation2], 4
      %s17 = int_to_ptr.vmem [resolvable:$true] %s16
      %19 = dma.hbm_to_vmem [thread:$0]  %s0, 32, %s17, [#allocation3]
    $region5: #{tpu_custom_call.1} parent=1 // pred_fallthru
      _
    // Predicated region
    $region6: #{tpu_custom_call.1} parent=1 // pred_check
      _
    $region7: #{tpu_custom_call.1} parent=1 // pred_check_branch
      %21 = sbr.rel (0) target = $region9
    $region8: #{tpu_custom_call.1} parent=1 // pred_region
      %s23 = ssub.s32 32, 32
      %24 = vsyncadd [#allocation6], %s23
      %s26 = sshll.u32 [#allocation5], 4
      %s27 = int_to_ptr.vmem [resolvable:$true] %s26
      %29 = dma.hbm_to_vmem [thread:$0]  %s1, 32, %s27, [#allocation6]
    $region9: #{tpu_custom_call.1} parent=1 // pred_fallthru
      _
    // Predicated region
    $region10: #{tpu_custom_call.1} parent=1 // pred_check
      _
    $region11: #{tpu_custom_call.1} parent=1 // pred_check_branch
      %31 = sbr.rel (0) target = $region13
    $region12: #{tpu_custom_call.1} parent=1 // pred_region
      %32 = dma.done [#allocation3], 32
    $region13: #{tpu_custom_call.1} parent=1 // pred_fallthru
      _
    // Predicated region
    $region14: #{tpu_custom_call.1} parent=1 // pred_check
      _
    $region15: #{tpu_custom_call.1} parent=1 // pred_check_branch
      %34 = sbr.rel (0) target = $region17
    $region16: #{tpu_custom_call.1} parent=1 // pred_region
      %35 = dma.done [#allocation6], 32
    $region17: #{tpu_custom_call.1} parent=1 // pred_fallthru
      _
    %p36 = scmp.eq.s32.totalorder 0, 0
    // Predicated region
    $region18: #{tpu_custom_call.1} parent=1 // pred_check
      %p37 = pneg %p36
    $region19: #{tpu_custom_call.1} parent=1 // pred_check_branch
      %39 = sbr.rel (%p37) target = $region21
    $region20: #{tpu_custom_call.1} parent=1 // pred_region
      %vm40 = vcmask 57344
      %41 = vst.msk [vmem:[#allocation7] sm:$0x1] %vm40, 0.0
    $region21: #{tpu_custom_call.1} parent=1 // pred_fallthru
      _
    %v42 = vld [vmem:[#allocation2] sm:$0x3]
    %v43 = vld [vmem:[#allocation5] sm:$0x3]
    %v44 = vmax.f32 %v42, 0.0
    %v45 = vmul.f32 %v42, %v43
    %v46 = vsub.f32 %v44, %v45
    %v47 = vand.u32 2147483647, %v42
    %v48 = vsub.f32 0.0, %v47
    %v49 = vmul.f32 %v48, 1.442695
    %v50 = vpow.pop %v49
    %v51 = vadd.f32 %v50, 1.0
    %v52 = vlog2.pop %v51
    %v53 = vmul.f32 %v52, 0.6931472
    %v54 = vmul.f32 -0.5, %v50
    %v55 = vadd.f32 %v54, 1.0
    %v56 = vmul.f32 %v55, %v50
    %v57 = vand.u32 2147483647, %v50
    %vm58 = vcmp.lt.f32.partialorder %v57, 0.0004427343
    %v59 = vsel %vm58, %v56, %v53
    %v60 = vadd.f32 %v46, %v59
    %v61 = vld [vmem:[#allocation7] sm:$0x1]
    %vm62 = vcmask 58368
    %v63 = vsel %vm62, %v60, 0.0
    %v64 = vrot.slane %v63, 4
    %v65 = vadd.f32 %v63, %v64
    %v66 = vrot.slane %v65, 2
    %v67 = vadd.f32 %v65, %v66
    %v68 = vrot.slane %v67, 1
    %v69 = vadd.f32 %v67, %v68
    %v70 = vadd.f32 %v61, %v69
    %vm71 = vcmask 57344
    %72 = vst.msk [vmem:[#allocation7] sm:$0x1] %vm71, %v70
    // Predicated region
    $region22: #{tpu_custom_call.1} parent=1 // pred_check
      _
    $region23: #{tpu_custom_call.1} parent=1 // pred_check_branch
      %74 = sbr.rel (0) target = $region25
    $region24: #{tpu_custom_call.1} parent=1 // pred_region
      %s76 = ssub.s32 16, 16
      %77 = vsyncadd [#allocation4], %s76
      %s79 = sshll.u32 [#allocation7], 4
      %s80 = int_to_ptr.vmem [resolvable:$true] %s79
      %82 = dma.vmem_to_hbm [thread:$0]  %s80, 16, %s2, [#allocation4]
    $region25: #{tpu_custom_call.1} parent=1 // pred_fallthru
      _
    // Predicated region
    $region26: #{tpu_custom_call.1} parent=1 // pred_check
      _
    $region27: #{tpu_custom_call.1} parent=1 // pred_check_branch
      %84 = sbr.rel (0) target = $region29
    $region28: #{tpu_custom_call.1} parent=1 // pred_region
      %85 = dma.done [#allocation4], 16
    $region29: #{tpu_custom_call.1} parent=1 // pred_fallthru
      _
    %86 = vsyncpa [#allocation3], 1
    %87 = vsyncpa [#allocation6], 1
    %88 = vsyncpa [#allocation4], 1

</llo_original>
